<compile_context>
chip_gen: v7x
topology: tpu7x:2x2x1
jax: 0.10.0
libtpu: 0.0.40
codegen_flags: <defaults>
</compile_context>

<pallas_src>
import jax
import jax.numpy as jnp
import numpy as np
from jax import lax
from jax.experimental import pallas as pl
from jax.experimental.pallas import tpu as pltpu


def _graph_attn_loss_kernel(a_ref, r_ref, o_ref, acc_ref):
    # a_ref:   (B, G, R)  attention block (squeezed, NOT transposed)
    # r_ref:   (B, R, D)  roi-feature block
    # o_ref:   (1, 1)     final sum of squared errors (written once)
    # acc_ref: (R, R)     running per-(i,j) squared-error accumulator (VMEM)
    n = pl.program_id(0)

    @pl.when(n == 0)
    def _():
        acc_ref[...] = jnp.zeros_like(acc_ref)

    a = a_ref[...].astype(jnp.float32)          # (B, G, R)
    r = r_ref[...].astype(jnp.float32)          # (B, R, D)

    # --- attention cosine-similarity gram -------------------------------
    a_t = jnp.swapaxes(a, 1, 2)                 # (B, R, G), in-VMEM transpose
    attn_sim = jnp.einsum("brg,bsg->brs", a_t, a_t,
                          preferred_element_type=jnp.float32)   # (B, R, R)
    attn_sq = jnp.sum(a_t * a_t, axis=2)        # (B, R)
    inv_a = lax.rsqrt(attn_sq)                  # matches reference NaN behavior
    attn_sim = attn_sim * inv_a[:, :, None] * inv_a[:, None, :]

    # --- ROI cosine-similarity gram (NaN -> 0 via masked inverse norm) ---
    roi_sim = jnp.einsum("brd,bsd->brs", r, r,
                         preferred_element_type=jnp.float32)    # (B, R, R)
    roi_sq = jnp.sum(r * r, axis=2)             # (B, R)
    inv_r = jnp.where(roi_sq > 0.0, lax.rsqrt(roi_sq), 0.0)
    roi_sim = roi_sim * inv_r[:, :, None] * inv_r[:, None, :]

    # --- accumulate squared error (reduce over batch axis only) ----------
    diff = attn_sim - roi_sim                   # (B, R, R)
    acc_ref[...] += jnp.sum(diff * diff, axis=0)

    @pl.when(n == pl.num_programs(0) - 1)
    def _():
        o_ref[...] = jnp.sum(acc_ref[...], keepdims=True).astype(o_ref.dtype)


def graph_attention_loss(group_attn, rois, *, batch_size, world_size,
                         block_b=None):
    """Pallas implementation of GraphAttentionLoss.forward (world_size == 1)."""
    assert world_size == 1, "GatherLayer (distributed) path not implemented"
    N = world_size * batch_size
    assert group_attn.shape[0] == N and rois.shape[0] == N

    # glue: (N, 1, G, R) -> squeeze(1) only.  No HBM transpose; the per-block
    # transpose happens inside the kernel on the VMEM tile.
    a = jnp.squeeze(group_attn, axis=1)         # (N, G, R)
    _, G, R = a.shape
    D = rois.shape[-1]

    # Choose samples-per-step B against a conservative VMEM budget
    # (2 inputs x 2 pipeline buffers + (B,R,R) f32 intermediates).
    if block_b is None:
        bytes_per_sample = 4 * (2 * (G * R + R * D) + 4 * R * R)
        budget = 8 * 1024 * 1024                # leaves headroom on v7x (64 MiB)
        block_b = max(1, min(N, budget // max(bytes_per_sample, 1)))
    B = int(block_b)
    num_blocks = pl.cdiv(N, B)
    n_pad = num_blocks * B - N
    if n_pad > 0:
        # Pad with all-ones samples: their attn_sim and roi_sim are both all
        # ones, so padded samples contribute exactly zero squared error.
        a = jnp.concatenate([a, jnp.ones((n_pad, G, R), a.dtype)], axis=0)
        rois = jnp.concatenate([rois, jnp.ones((n_pad, R, D), rois.dtype)],
                               axis=0)

    sq_err_sum = pl.pallas_call(
        _graph_attn_loss_kernel,
        out_shape=jax.ShapeDtypeStruct((1, 1), jnp.float32),
        grid_spec=pltpu.PrefetchScalarGridSpec(
            num_scalar_prefetch=0,
            grid=(num_blocks,),
            in_specs=[
                pl.BlockSpec((B, G, R), lambda n: (n, 0, 0)),
                pl.BlockSpec((B, R, D), lambda n: (n, 0, 0)),
            ],
            out_specs=pl.BlockSpec((1, 1), lambda n: (0, 0)),
            scratch_shapes=[pltpu.VMEM((R, R), jnp.float32)],
        ),
        compiler_params=pltpu.CompilerParams(
            dimension_semantics=("arbitrary",)),   # output accumulates over grid
    )(a, rois)

    # MSELoss default reduction = mean over all N*R*R elements.
    return sq_err_sum[0, 0] / jnp.float32(N * R * R)


def _reference(group_attn, rois):
    """Pure-JAX reference mirroring the PyTorch forward exactly."""
    a = jnp.transpose(jnp.squeeze(group_attn, axis=1), (0, 2, 1))   # (N, R, G)
    attn_sim = jnp.einsum("nrg,nsg->nrs", a, a)
    attn_n = jnp.linalg.norm(a, axis=2, keepdims=True)
    attn_sim = attn_sim / (attn_n @ jnp.swapaxes(attn_n, 1, 2))
    roi_sim = jnp.einsum("nrd,nsd->nrs", rois, rois)
    roi_n = jnp.linalg.norm(rois, axis=2, keepdims=True)
    roi_sim = roi_sim / (roi_n @ jnp.swapaxes(roi_n, 1, 2))
    roi_sim = jnp.where(jnp.isnan(roi_sim), 0.0, roi_sim)
    return jnp.mean((attn_sim - roi_sim) ** 2)


if __name__ == "__main__":
    batch_size, world_size = 2, 1
    N = batch_size * world_size
    G, R, D = 16, 8, 32

    key = jax.random.PRNGKey(0)
    k1, k2 = jax.random.split(key)
    group_attn = jax.random.normal(k1, (N, 1, G, R), dtype=jnp.float32)
    rois = jax.random.normal(k2, (N, R, D), dtype=jnp.float32)
    # exercise the NaN -> 0 path: one all-zero ROI row
    rois = rois.at[0, 3, :].set(0.0)

    loss = graph_attention_loss(group_attn, rois,
                                batch_size=batch_size, world_size=world_size)
    loss = jax.block_until_ready(loss)

    ref = jax.block_until_ready(_reference(group_attn, rois))
    np.testing.assert_allclose(np.asarray(loss), np.asarray(ref),
                               rtol=1e-5, atol=1e-5)
    print("KERNEL_OK")
</pallas_src>

<mosaic_0001>
module attributes {stable_mosaic.version = 11 : i64} {
  func.func @_graph_attn_loss_kernel(%arg0: i32, %arg1: memref<2x16x8xf32, #tpu.memory_space<vmem>>, %arg2: memref<2x8x32xf32, #tpu.memory_space<vmem>>, %arg3: memref<1x1xf32, #tpu.memory_space<vmem>>, %arg4: memref<8x8xf32, #tpu.memory_space<vmem>>) attributes {dimension_semantics = [#tpu.dimension_semantics<arbitrary>], iteration_bounds = array<i64: 1>, scalar_prefetch = 0 : i64, scratch_operands = 1 : i64, tpu.core_type = #tpu.core_type<tc>, window_params = [{transform_indices = @transform_0, window_bounds = array<i64: 2, 16, 8>}, {transform_indices = @transform_1, window_bounds = array<i64: 2, 8, 32>}, {pipeline_mode = #tpu.pipeline_mode<synchronous>, transform_indices = @transform_2, window_bounds = array<i64: 1, 1>}]} {
    %c0_i32 = arith.constant 0 : i32
    %0 = arith.cmpi eq, %arg0, %c0_i32 : i32
    %1 = arith.extui %0 : i1 to i32
    %c0_i32_0 = arith.constant 0 : i32
    %2 = arith.cmpi ne, %1, %c0_i32_0 : i32
    scf.if %2 {
      %cst_18 = arith.constant 0.000000e+00 : f32
      %39 = vector.broadcast %cst_18 : f32 to vector<8x8xf32>
      %c0_19 = arith.constant 0 : index
      %c0_20 = arith.constant 0 : index
      %40 = vector.load %arg4[%c0_19, %c0_20] : memref<8x8xf32, #tpu.memory_space<vmem>>, vector<8x8xf32>
      tpu.vector_store %arg4[%c0_19, %c0_20], %39 {strides = array<i32>} : memref<8x8xf32, #tpu.memory_space<vmem>>, vector<8x8xf32>,
    } else {
    }
    %c0 = arith.constant 0 : index
    %c0_1 = arith.constant 0 : index
    %c0_2 = arith.constant 0 : index
    %3 = vector.load %arg1[%c0, %c0_1, %c0_2] : memref<2x16x8xf32, #tpu.memory_space<vmem>>, vector<2x16x8xf32>
    %c0_3 = arith.constant 0 : index
    %c0_4 = arith.constant 0 : index
    %c0_5 = arith.constant 0 : index
    %4 = vector.load %arg2[%c0_3, %c0_4, %c0_5] : memref<2x8x32xf32, #tpu.memory_space<vmem>>, vector<2x8x32xf32>
    %5 = tpu.transpose %3, [0, 2, 1] : vector<2x16x8xf32> -> vector<2x8x16xf32>
    "tpu.trace_start"() <{level = 10 : i32, message = "brg,bsg->brs"}> : () -> ()
    %cst = arith.constant dense<0.000000e+00> : vector<2x8x8xf32>
    %6 = tpu.matmul %5, %5, %cst {dimension_numbers = #tpu.dot_dimension_numbers<[2], [2], [1], [1], [0, 0, 0, 1, 1, 1], [0], [0]>} : vector<2x8x16xf32>, vector<2x8x16xf32>, vector<2x8x8xf32> -> vector<2x8x8xf32>
    "tpu.trace_stop"() : () -> ()
    %7 = arith.mulf %5, %5 : vector<2x8x16xf32>
    %cst_6 = arith.constant dense<0.000000e+00> : vector<2x8xf32>
    %8 = vector.multi_reduction <add>, %7, %cst_6 [2] : vector<2x8x16xf32> to vector<2x8xf32>
    %9 = math.rsqrt %8 : vector<2x8xf32>
    %10 = vector.shape_cast %9 : vector<2x8xf32> to vector<2x8x1xf32>
    %11 = vector.broadcast %10 : vector<2x8x1xf32> to vector<2x8x8xf32>
    %12 = arith.mulf %6, %11 : vector<2x8x8xf32>
    %13 = vector.shape_cast %9 : vector<2x8xf32> to vector<2x1x8xf32>
    %14 = vector.broadcast %13 : vector<2x1x8xf32> to vector<2x8x8xf32>
    %15 = arith.mulf %12, %14 : vector<2x8x8xf32>
    "tpu.trace_start"() <{level = 10 : i32, message = "brd,bsd->brs"}> : () -> ()
    %cst_7 = arith.constant dense<0.000000e+00> : vector<2x8x8xf32>
    %16 = tpu.matmul %4, %4, %cst_7 {dimension_numbers = #tpu.dot_dimension_numbers<[2], [2], [1], [1], [0, 0, 0, 1, 1, 1], [0], [0]>} : vector<2x8x32xf32>, vector<2x8x32xf32>, vector<2x8x8xf32> -> vector<2x8x8xf32>
    "tpu.trace_stop"() : () -> ()
    %17 = arith.mulf %4, %4 : vector<2x8x32xf32>
    %cst_8 = arith.constant dense<0.000000e+00> : vector<2x8xf32>
    %18 = vector.multi_reduction <add>, %17, %cst_8 [2] : vector<2x8x32xf32> to vector<2x8xf32>
    %cst_9 = arith.constant 0.000000e+00 : f32
    %19 = vector.broadcast %cst_9 : f32 to vector<2x8xf32>
    %20 = arith.cmpf ogt, %18, %19 : vector<2x8xf32>
    %21 = math.rsqrt %18 : vector<2x8xf32>
    %cst_10 = arith.constant 0.000000e+00 : f32
    %22 = vector.broadcast %cst_10 : f32 to vector<2x8xf32>
    %23 = arith.select %20, %21, %22 : vector<2x8xi1>, vector<2x8xf32>
    %24 = vector.shape_cast %23 : vector<2x8xf32> to vector<2x8x1xf32>
    %25 = vector.broadcast %24 : vector<2x8x1xf32> to vector<2x8x8xf32>
    %26 = arith.mulf %16, %25 : vector<2x8x8xf32>
    %27 = vector.shape_cast %23 : vector<2x8xf32> to vector<2x1x8xf32>
    %28 = vector.broadcast %27 : vector<2x1x8xf32> to vector<2x8x8xf32>
    %29 = arith.mulf %26, %28 : vector<2x8x8xf32>
    %30 = arith.subf %15, %29 : vector<2x8x8xf32>
    %c0_11 = arith.constant 0 : index
    %c0_12 = arith.constant 0 : index
    %31 = vector.load %arg4[%c0_11, %c0_12] : memref<8x8xf32, #tpu.memory_space<vmem>>, vector<8x8xf32>
    %32 = arith.mulf %30, %30 : vector<2x8x8xf32>
    %cst_13 = arith.constant dense<0.000000e+00> : vector<8x8xf32>
    %33 = vector.multi_reduction <add>, %32, %cst_13 [0] : vector<2x8x8xf32> to vector<8x8xf32>
    %34 = arith.addf %31, %33 : vector<8x8xf32>
    %c0_14 = arith.constant 0 : index
    %c0_15 = arith.constant 0 : index
    %35 = vector.load %arg4[%c0_14, %c0_15] : memref<8x8xf32, #tpu.memory_space<vmem>>, vector<8x8xf32>
    tpu.vector_store %arg4[%c0_14, %c0_15], %34 {strides = array<i32>} : memref<8x8xf32, #tpu.memory_space<vmem>>, vector<8x8xf32>,
    %c0_i32_16 = arith.constant 0 : i32
    %36 = arith.cmpi eq, %arg0, %c0_i32_16 : i32
    %37 = arith.extui %36 : i1 to i32
    %c0_i32_17 = arith.constant 0 : i32
    %38 = arith.cmpi ne, %37, %c0_i32_17 : i32
    scf.if %38 {
      %c0_18 = arith.constant 0 : index
      %c0_19 = arith.constant 0 : index
      %39 = vector.load %arg4[%c0_18, %c0_19] : memref<8x8xf32, #tpu.memory_space<vmem>>, vector<8x8xf32>
      %40 = vector.shape_cast %39 : vector<8x8xf32> to vector<1x8x8xf32>
      %cst_20 = arith.constant dense<0.000000e+00> : vector<1xf32>
      %41 = vector.multi_reduction <add>, %40, %cst_20 [1, 2] : vector<1x8x8xf32> to vector<1xf32>
      %42 = vector.shape_cast %41 : vector<1xf32> to vector<1x1x1xf32>
      %43 = vector.extract %42[0, 0, 0] : f32 from vector<1x1x1xf32>
      %44 = vector.broadcast %43 : f32 to vector<1x1xf32>
      %c0_21 = arith.constant 0 : index
      %c0_22 = arith.constant 0 : index
      %45 = vector.load %arg3[%c0_21, %c0_22] : memref<1x1xf32, #tpu.memory_space<vmem>>, vector<1x1xf32>
      tpu.vector_store %arg3[%c0_21, %c0_22], %44 {strides = array<i32>} : memref<1x1xf32, #tpu.memory_space<vmem>>, vector<1x1xf32>,
    } else {
    }
    return
  }
  func.func @transform_0(%arg0: i32) -> (i32, i32, i32) {
    %c0_i32 = arith.constant 0 : i32
    %c0_i32_0 = arith.constant 0 : i32
    %c0_i32_1 = arith.constant 0 : i32
    return %arg0, %c0_i32, %c0_i32_0 : i32, i32, i32
  }
  func.func @transform_1(%arg0: i32) -> (i32, i32, i32) {
    %c0_i32 = arith.constant 0 : i32
    %c0_i32_0 = arith.constant 0 : i32
    %c0_i32_1 = arith.constant 0 : i32
    return %arg0, %c0_i32, %c0_i32_0 : i32, i32, i32
  }
  func.func @transform_2(%arg0: i32) -> (i32, i32) {
    %c0_i32 = arith.constant 0 : i32
    %c0_i32_0 = arith.constant 0 : i32
    %c0_i32_1 = arith.constant 0 : i32
    return %c0_i32, %c0_i32_0 : i32, i32
  }
}

</mosaic_0001>

<llo_original>
// kernel: tpu_custom_call.1
$region0: #{tpu_custom_call.1}
  #allocation0 [shape = 'u32[]', space=smem, size = 0x4, offset = 0x4, fixed_abs, tag = 'smem constant byte address 0x4 - core index']
  #allocation1 [shape = 'u32[144,128]{1,0:T(1,128)}', space=vmem, size = 0x12000, scoped, tag = 'internal scratch']
  #allocation2 [shape = 'f32[8,8]{1,0:T(8,128)}', space=vmem, size = 0x1000, scoped, tag = 'scratch operand']
  %s0 = inlined_call_operand.vmem [shape: f32[2,16,8], index: 0, kind: input, shape index: {}]
  %s1 = inlined_call_operand.vmem [shape: f32[2,8,32], index: 1, kind: input, shape index: {}]
  %s2 = inlined_call_operand.hbm [shape: f32[1,1], index: 2, kind: output, shape index: {}]
  %s3 = sld [smem:[#allocation0]]
  $region26: #{tpu_custom_call.1} parent=0
    _
  %s5 = ssub.s32 1, %s3
  %s6 = scalar_select 0, %s5, %s3
  $region1: #{tpu_custom_call.1} parent=0
    #allocation3 [shape = 'u8[512]{0}', space=vmem, size = 0x400, scoped, tag = 'output window, operand 0, single buffered']
    #allocation4 [shape = 's32[1]{0}', space=sflag, size = 0x4, scoped, tag = 'scoped memory for tpu_custom_call.1']
    %7 = vsyncpa [#allocation4], 0
    // Predicated region
    $region2: #{tpu_custom_call.1} parent=1 // pred_check
      _
    $region3: #{tpu_custom_call.1} parent=1 // pred_check_branch
      %9 = sbr.rel (0) target = $region5
    $region4: #{tpu_custom_call.1} parent=1 // pred_region
      _
    $region5: #{tpu_custom_call.1} parent=1 // pred_fallthru
      _
    // Predicated region
    $region6: #{tpu_custom_call.1} parent=1 // pred_check
      _
    $region7: #{tpu_custom_call.1} parent=1 // pred_check_branch
      %11 = sbr.rel (0) target = $region9
    $region8: #{tpu_custom_call.1} parent=1 // pred_region
      _
    $region9: #{tpu_custom_call.1} parent=1 // pred_fallthru
      _
    %p12 = scmp.eq.s32.totalorder 0, 0
    // Predicated region
    $region10: #{tpu_custom_call.1} parent=1 // pred_check
      %p13 = pneg %p12
    $region11: #{tpu_custom_call.1} parent=1 // pred_check_branch
      %15 = sbr.rel (%p13) target = $region13
    $region12: #{tpu_custom_call.1} parent=1 // pred_region
      %vm16 = vcmask 64512
      %17 = vst.msk [vmem:[#allocation2] sm:$0xff] %vm16, 0.0
    $region13: #{tpu_custom_call.1} parent=1 // pred_fallthru
      _
    %v18 = vld [vmem:[%s0] sm:$0xff]
    %v19 = vld [vmem:[%s0 + $0x8] sm:$0xff]
    %v20 = vld [vmem:[%s0 + $0x10] sm:$0xff]
    %v21 = vld [vmem:[%s0 + $0x18] sm:$0xff]
    %v22 = vld [vmem:[%s1] sm:$0xff]
    %v23 = vld [vmem:[%s1 + $0x8] sm:$0xff]
    %24 = vxpose.xlu0.b32.start [1/16] %v18, 128
    %25 = vxpose.xlu0.b32.cont [2/16] %v19, 128
    %26 = vxpose.xlu0.b32.cont [3/16] 0.0, 128
    %27 = vxpose.xlu0.b32.cont [4/16] 0.0, 128
    %28 = vxpose.xlu0.b32.cont [5/16] 0.0, 128
    %29 = vxpose.xlu0.b32.cont [6/16] 0.0, 128
    %30 = vxpose.xlu0.b32.cont [7/16] 0.0, 128
    %31 = vxpose.xlu0.b32.cont [8/16] 0.0, 128
    %32 = vxpose.xlu0.b32.cont [9/16] 0.0, 128
    %33 = vxpose.xlu0.b32.cont [10/16] 0.0, 128
    %34 = vxpose.xlu0.b32.cont [11/16] 0.0, 128
    %35 = vxpose.xlu0.b32.cont [12/16] 0.0, 128
    %36 = vxpose.xlu0.b32.cont [13/16] 0.0, 128
    %37 = vxpose.xlu0.b32.cont [14/16] 0.0, 128
    %38 = vxpose.xlu0.b32.cont [15/16] 0.0, 128
    %39 = vxpose.xlu0.b32.end [16/16] 0.0, 128
    %v40 = vpop.trf.xlu0
    %v41 = vpop.trf.xlu0
    %v42 = vpop.trf.xlu0
    %v43 = vpop.trf.xlu0
    %v44 = vpop.trf.xlu0
    %v45 = vpop.trf.xlu0
    %v46 = vpop.trf.xlu0
    %v47 = vpop.trf.xlu0
    %v48 = vpop.trf.xlu0
    %v49 = vpop.trf.xlu0
    %v50 = vpop.trf.xlu0
    %v51 = vpop.trf.xlu0
    %v52 = vpop.trf.xlu0
    %v53 = vpop.trf.xlu0
    %v54 = vpop.trf.xlu0
    %v55 = vpop.trf.xlu0
    %56 = vxpose.xlu0.b32.start [1/16] %v20, 128
    %57 = vxpose.xlu0.b32.cont [2/16] %v21, 128
    %58 = vxpose.xlu0.b32.cont [3/16] 0.0, 128
    %59 = vxpose.xlu0.b32.cont [4/16] 0.0, 128
    %60 = vxpose.xlu0.b32.cont [5/16] 0.0, 128
    %61 = vxpose.xlu0.b32.cont [6/16] 0.0, 128
    %62 = vxpose.xlu0.b32.cont [7/16] 0.0, 128
    %63 = vxpose.xlu0.b32.cont [8/16] 0.0, 128
    %64 = vxpose.xlu0.b32.cont [9/16] 0.0, 128
    %65 = vxpose.xlu0.b32.cont [10/16] 0.0, 128
    %66 = vxpose.xlu0.b32.cont [11/16] 0.0, 128
    %67 = vxpose.xlu0.b32.cont [12/16] 0.0, 128
    %68 = vxpose.xlu0.b32.cont [13/16] 0.0, 128
    %69 = vxpose.xlu0.b32.cont [14/16] 0.0, 128
    %70 = vxpose.xlu0.b32.cont [15/16] 0.0, 128
    %71 = vxpose.xlu0.b32.end [16/16] 0.0, 128
    %v72 = vpop.trf.xlu0
    %v73 = vpop.trf.xlu0
    %v74 = vpop.trf.xlu0
    %v75 = vpop.trf.xlu0
    %v76 = vpop.trf.xlu0
    %v77 = vpop.trf.xlu0
    %v78 = vpop.trf.xlu0
    %v79 = vpop.trf.xlu0
    %v80 = vpop.trf.xlu0
    %v81 = vpop.trf.xlu0
    %v82 = vpop.trf.xlu0
    %v83 = vpop.trf.xlu0
    %v84 = vpop.trf.xlu0
    %v85 = vpop.trf.xlu0
    %v86 = vpop.trf.xlu0
    %v87 = vpop.trf.xlu0
    %vm88 = vcmask 130048
    %v90 = vsel %vm88, %v40, 0
    %92 = vmatprep.subr.mxu0 0.0
    %93 = vmatpush1.xpose.msra.mxu0 %v90
    %94 = vmatprep.subr.mxu0 0.0
    %95 = vmatpush1.xpose.msra.mxu0 0.0
    %96 = vmatprep.subr.mxu0 0.0
    %97 = vmatpush1.xpose.msra.mxu0 0.0
    %98 = vmatprep.subr.mxu0 0.0
    %99 = vmatpush1.xpose.msra.mxu0 0.0
    %100 = vmatprep.subr.mxu0 0.0
    %101 = vmatpush1.xpose.msra.mxu0 0.0
    %102 = vmatprep.subr.mxu0 0.0
    %103 = vmatpush1.xpose.msra.mxu0 0.0
    %104 = vmatprep.subr.mxu0 0.0
    %105 = vmatpush1.xpose.msra.mxu0 0.0
    %106 = vmatprep.subr.mxu0 0.0
    %107 = vmatpush1.xpose.msra.mxu0 0.0
    %108 = vmatprep.subr.mxu0 0.0
    %109 = vmatpush1.xpose.msra.mxu0 0.0
    %110 = vmatprep.subr.mxu0 0.0
    %111 = vmatpush1.xpose.msra.mxu0 0.0
    %112 = vmatprep.subr.mxu0 0.0
    %113 = vmatpush1.xpose.msra.mxu0 0.0
    %114 = vmatprep.subr.mxu0 0.0
    %115 = vmatpush1.xpose.msra.mxu0 0.0
    %116 = vmatprep.subr.mxu0 0.0
    %117 = vmatpush1.xpose.msra.mxu0 0.0
    %118 = vmatprep.subr.mxu0 0.0
    %119 = vmatpush1.xpose.msra.mxu0 0.0
    %120 = vmatprep.subr.mxu0 0.0
    %121 = vmatpush1.xpose.msra.mxu0 0.0
    %122 = vmatprep.subr.mxu0 0.0
    %123 = vmatpush1.xpose.msra.mxu0 0.0
    %124 = vmatprep.subr.mxu0 0.0
    %125 = vmatpush1.xpose.msra.mxu0 0.0
    %126 = vmatprep.subr.mxu0 0.0
    %127 = vmatpush1.xpose.msra.mxu0 0.0
    %128 = vmatprep.subr.mxu0 0.0
    %129 = vmatpush1.xpose.msra.mxu0 0.0
    %130 = vmatprep.subr.mxu0 0.0
    %131 = vmatpush1.xpose.msra.mxu0 0.0
    %132 = vmatprep.subr.mxu0 0.0
    %133 = vmatpush1.xpose.msra.mxu0 0.0
    %134 = vmatprep.subr.mxu0 0.0
    %135 = vmatpush1.xpose.msra.mxu0 0.0
    %136 = vmatprep.subr.mxu0 0.0
    %137 = vmatpush1.xpose.msra.mxu0 0.0
    %138 = vmatprep.subr.mxu0 0.0
    %139 = vmatpush1.xpose.msra.mxu0 0.0
    %140 = vmatprep.subr.mxu0 0.0
    %141 = vmatpush1.xpose.msra.mxu0 0.0
    %142 = vmatprep.subr.mxu0 0.0
    %143 = vmatpush1.xpose.msra.mxu0 0.0
    %144 = vmatprep.subr.mxu0 0.0
    %145 = vmatpush1.xpose.msra.mxu0 0.0
    %146 = vmatprep.subr.mxu0 0.0
    %147 = vmatpush1.xpose.msra.mxu0 0.0
    %148 = vmatprep.subr.mxu0 0.0
    %149 = vmatpush1.xpose.msra.mxu0 0.0
    %150 = vmatprep.subr.mxu0 0.0
    %151 = vmatpush1.xpose.msra.mxu0 0.0
    %152 = vmatprep.subr.mxu0 0.0
    %153 = vmatpush1.xpose.msra.mxu0 0.0
    %154 = vmatprep.subr.mxu0 0.0
    %155 = vmatpush1.xpose.msra.mxu0 0.0
    %156 = vmatprep.mubr.f32.mxu0 0.0
    %157 = vmatmul.mubr.f32.gmra.mrb[0].mxu0 %v90
    %v158 = vpop.f32.mrb[0].mxu0
    %v159 = vadd.f32 0.0, %v158
    %v160 = vpop.f32.mrb[0].mxu0
    %161 = vdwg.mxu0
    %v163 = vsel %vm88, %v72, 0
    %165 = vmatprep.subr.mxu0 0.0
    %166 = vmatpush1.xpose.msra.mxu0 %v163
    %167 = vmatprep.subr.mxu0 0.0
    %168 = vmatpush1.xpose.msra.mxu0 0.0
    %169 = vmatprep.subr.mxu0 0.0
    %170 = vmatpush1.xpose.msra.mxu0 0.0
    %171 = vmatprep.subr.mxu0 0.0
    %172 = vmatpush1.xpose.msra.mxu0 0.0
    %173 = vmatprep.subr.mxu0 0.0
    %174 = vmatpush1.xpose.msra.mxu0 0.0
    %175 = vmatprep.subr.mxu0 0.0
    %176 = vmatpush1.xpose.msra.mxu0 0.0
    %177 = vmatprep.subr.mxu0 0.0
    %178 = vmatpush1.xpose.msra.mxu0 0.0
    %179 = vmatprep.subr.mxu0 0.0
    %180 = vmatpush1.xpose.msra.mxu0 0.0
    %181 = vmatprep.subr.mxu0 0.0
    %182 = vmatpush1.xpose.msra.mxu0 0.0
    %183 = vmatprep.subr.mxu0 0.0
    %184 = vmatpush1.xpose.msra.mxu0 0.0
    %185 = vmatprep.subr.mxu0 0.0
    %186 = vmatpush1.xpose.msra.mxu0 0.0
    %187 = vmatprep.subr.mxu0 0.0
    %188 = vmatpush1.xpose.msra.mxu0 0.0
    %189 = vmatprep.subr.mxu0 0.0
    %190 = vmatpush1.xpose.msra.mxu0 0.0
    %191 = vmatprep.subr.mxu0 0.0
    %192 = vmatpush1.xpose.msra.mxu0 0.0
    %193 = vmatprep.subr.mxu0 0.0
    %194 = vmatpush1.xpose.msra.mxu0 0.0
    %195 = vmatprep.subr.mxu0 0.0
    %196 = vmatpush1.xpose.msra.mxu0 0.0
    %197 = vmatprep.subr.mxu0 0.0
    %198 = vmatpush1.xpose.msra.mxu0 0.0
    %199 = vmatprep.subr.mxu0 0.0
    %200 = vmatpush1.xpose.msra.mxu0 0.0
    %201 = vmatprep.subr.mxu0 0.0
    %202 = vmatpush1.xpose.msra.mxu0 0.0
    %203 = vmatprep.subr.mxu0 0.0
    %204 = vmatpush1.xpose.msra.mxu0 0.0
    %205 = vmatprep.subr.mxu0 0.0
    %206 = vmatpush1.xpose.msra.mxu0 0.0
    %207 = vmatprep.subr.mxu0 0.0
    %208 = vmatpush1.xpose.msra.mxu0 0.0
    %209 = vmatprep.subr.mxu0 0.0
    %210 = vmatpush1.xpose.msra.mxu0 0.0
    %211 = vmatprep.subr.mxu0 0.0
    %212 = vmatpush1.xpose.msra.mxu0 0.0
    %213 = vmatprep.subr.mxu0 0.0
    %214 = vmatpush1.xpose.msra.mxu0 0.0
    %215 = vmatprep.subr.mxu0 0.0
    %216 = vmatpush1.xpose.msra.mxu0 0.0
    %217 = vmatprep.subr.mxu0 0.0
    %218 = vmatpush1.xpose.msra.mxu0 0.0
    %219 = vmatprep.subr.mxu0 0.0
    %220 = vmatpush1.xpose.msra.mxu0 0.0
    %221 = vmatprep.subr.mxu0 0.0
    %222 = vmatpush1.xpose.msra.mxu0 0.0
    %223 = vmatprep.subr.mxu0 0.0
    %224 = vmatpush1.xpose.msra.mxu0 0.0
    %225 = vmatprep.subr.mxu0 0.0
    %226 = vmatpush1.xpose.msra.mxu0 0.0
    %227 = vmatprep.subr.mxu0 0.0
    %228 = vmatpush1.xpose.msra.mxu0 0.0
    %229 = vmatprep.mubr.f32.mxu0 0.0
    %230 = vmatmul.mubr.f32.gmra.mrb[0].mxu0 %v163
    %v231 = vpop.f32.mrb[0].mxu0
    %v232 = vadd.f32 0.0, %v231
    %v233 = vpop.f32.mrb[0].mxu0
    %234 = vdwg.mxu0
    %v235 = vmul.f32 %v40, %v40
    %v236 = vmul.f32 %v72, %v72
    %v237 = vsel %vm88, %v235, 0.0
    %238 = vadd.xlane.f32.xlu0 %v237
    %v239 = vpop.xlane.xlu0 %238
    %v240 = vsel %vm88, %v236, 0.0
    %241 = vadd.xlane.f32.xlu0 %v240
    %v242 = vpop.xlane.xlu0 %241
    %v243 = vrsqrt.pop %v239
    %v244 = vrsqrt.pop %v242
    %v245 = vmul.f32 %v159, %v243
    %v246 = vmul.f32 %v232, %v244
    %v249 = vlaneseq
    %v250 = vand.u32 %v249, 127
    %v251 = vlaneseq
    %v252 = vshrl.u32 %v251, 7
    %v253 = vsub.s32 %v250, %v252
    %v254 = vrot.slane %v243, %v253
    %v255 = vlaneseq
    %v256 = vshrl.u32 %v255, 7
    %v257 = vsub.s32 %v250, %v256
    %v258 = vrot.slane %v244, %v257
    %vm259 = vcmask 1042434
    %v260 = vsel %vm259, %v254, %v254
    %vm261 = vcmask 1043459
    %v262 = vsel %vm261, %v254, %v260
    %vm263 = vcmask 1044484
    %v264 = vsel %vm263, %v254, %v262
    %vm265 = vcmask 1045509
    %v266 = vsel %vm265, %v254, %v264
    %vm267 = vcmask 1046534
    %v268 = vsel %vm267, %v254, %v266
    %vm269 = vcmask 1047559
    %v270 = vsel %vm269, %v254, %v268
    %v271 = vsel %vm259, %v258, %v258
    %v272 = vsel %vm261, %v258, %v271
    %v273 = vsel %vm263, %v258, %v272
    %v274 = vsel %vm265, %v258, %v273
    %v275 = vsel %vm267, %v258, %v274
    %v276 = vsel %vm269, %v258, %v275
    %v279 = vmul.f32 %v245, %v270
    %v280 = vmul.f32 %v246, %v276
    %vm281 = vcmask 261120
    %v283 = vsel %vm281, %v22, 0
    %285 = vmatprep.subr.mxu0 0.0
    %286 = vmatpush1.xpose.msra.mxu0 %v283
    %287 = vmatprep.subr.mxu0 0.0
    %288 = vmatpush1.xpose.msra.mxu0 0.0
    %289 = vmatprep.subr.mxu0 0.0
    %290 = vmatpush1.xpose.msra.mxu0 0.0
    %291 = vmatprep.subr.mxu0 0.0
    %292 = vmatpush1.xpose.msra.mxu0 0.0
    %293 = vmatprep.subr.mxu0 0.0
    %294 = vmatpush1.xpose.msra.mxu0 0.0
    %295 = vmatprep.subr.mxu0 0.0
    %296 = vmatpush1.xpose.msra.mxu0 0.0
    %297 = vmatprep.subr.mxu0 0.0
    %298 = vmatpush1.xpose.msra.mxu0 0.0
    %299 = vmatprep.subr.mxu0 0.0
    %300 = vmatpush1.xpose.msra.mxu0 0.0
    %301 = vmatprep.subr.mxu0 0.0
    %302 = vmatpush1.xpose.msra.mxu0 0.0
    %303 = vmatprep.subr.mxu0 0.0
    %304 = vmatpush1.xpose.msra.mxu0 0.0
    %305 = vmatprep.subr.mxu0 0.0
    %306 = vmatpush1.xpose.msra.mxu0 0.0
    %307 = vmatprep.subr.mxu0 0.0
    %308 = vmatpush1.xpose.msra.mxu0 0.0
    %309 = vmatprep.subr.mxu0 0.0
    %310 = vmatpush1.xpose.msra.mxu0 0.0
    %311 = vmatprep.subr.mxu0 0.0
    %312 = vmatpush1.xpose.msra.mxu0 0.0
    %313 = vmatprep.subr.mxu0 0.0
    %314 = vmatpush1.xpose.msra.mxu0 0.0
    %315 = vmatprep.subr.mxu0 0.0
    %316 = vmatpush1.xpose.msra.mxu0 0.0
    %317 = vmatprep.subr.mxu0 0.0
    %318 = vmatpush1.xpose.msra.mxu0 0.0
    %319 = vmatprep.subr.mxu0 0.0
    %320 = vmatpush1.xpose.msra.mxu0 0.0
    %321 = vmatprep.subr.mxu0 0.0
    %322 = vmatpush1.xpose.msra.mxu0 0.0
    %323 = vmatprep.subr.mxu0 0.0
    %324 = vmatpush1.xpose.msra.mxu0 0.0
    %325 = vmatprep.subr.mxu0 0.0
    %326 = vmatpush1.xpose.msra.mxu0 0.0
    %327 = vmatprep.subr.mxu0 0.0
    %328 = vmatpush1.xpose.msra.mxu0 0.0
    %329 = vmatprep.subr.mxu0 0.0
    %330 = vmatpush1.xpose.msra.mxu0 0.0
    %331 = vmatprep.subr.mxu0 0.0
    %332 = vmatpush1.xpose.msra.mxu0 0.0
    %333 = vmatprep.subr.mxu0 0.0
    %334 = vmatpush1.xpose.msra.mxu0 0.0
    %335 = vmatprep.subr.mxu0 0.0
    %336 = vmatpush1.xpose.msra.mxu0 0.0
    %337 = vmatprep.subr.mxu0 0.0
    %338 = vmatpush1.xpose.msra.mxu0 0.0
    %339 = vmatprep.subr.mxu0 0.0
    %340 = vmatpush1.xpose.msra.mxu0 0.0
    %341 = vmatprep.subr.mxu0 0.0
    %342 = vmatpush1.xpose.msra.mxu0 0.0
    %343 = vmatprep.subr.mxu0 0.0
    %344 = vmatpush1.xpose.msra.mxu0 0.0
    %345 = vmatprep.subr.mxu0 0.0
    %346 = vmatpush1.xpose.msra.mxu0 0.0
    %347 = vmatprep.subr.mxu0 0.0
    %348 = vmatpush1.xpose.msra.mxu0 0.0
    %349 = vmatprep.mubr.f32.mxu0 0.0
    %350 = vmatmul.mubr.f32.gmra.mrb[0].mxu0 %v283
    %v351 = vpop.f32.mrb[0].mxu0
    %v352 = vadd.f32 0.0, %v351
    %v353 = vpop.f32.mrb[0].mxu0
    %354 = vdwg.mxu0
    %v356 = vsel %vm281, %v23, 0
    %358 = vmatprep.subr.mxu0 0.0
    %359 = vmatpush1.xpose.msra.mxu0 %v356
    %360 = vmatprep.subr.mxu0 0.0
    %361 = vmatpush1.xpose.msra.mxu0 0.0
    %362 = vmatprep.subr.mxu0 0.0
    %363 = vmatpush1.xpose.msra.mxu0 0.0
    %364 = vmatprep.subr.mxu0 0.0
    %365 = vmatpush1.xpose.msra.mxu0 0.0
    %366 = vmatprep.subr.mxu0 0.0
    %367 = vmatpush1.xpose.msra.mxu0 0.0
    %368 = vmatprep.subr.mxu0 0.0
    %369 = vmatpush1.xpose.msra.mxu0 0.0
    %370 = vmatprep.subr.mxu0 0.0
    %371 = vmatpush1.xpose.msra.mxu0 0.0
    %372 = vmatprep.subr.mxu0 0.0
    %373 = vmatpush1.xpose.msra.mxu0 0.0
    %374 = vmatprep.subr.mxu0 0.0
    %375 = vmatpush1.xpose.msra.mxu0 0.0
    %376 = vmatprep.subr.mxu0 0.0
    %377 = vmatpush1.xpose.msra.mxu0 0.0
    %378 = vmatprep.subr.mxu0 0.0
    %379 = vmatpush1.xpose.msra.mxu0 0.0
    %380 = vmatprep.subr.mxu0 0.0
    %381 = vmatpush1.xpose.msra.mxu0 0.0
    %382 = vmatprep.subr.mxu0 0.0
    %383 = vmatpush1.xpose.msra.mxu0 0.0
    %384 = vmatprep.subr.mxu0 0.0
    %385 = vmatpush1.xpose.msra.mxu0 0.0
    %386 = vmatprep.subr.mxu0 0.0
    %387 = vmatpush1.xpose.msra.mxu0 0.0
    %388 = vmatprep.subr.mxu0 0.0
    %389 = vmatpush1.xpose.msra.mxu0 0.0
    %390 = vmatprep.subr.mxu0 0.0
    %391 = vmatpush1.xpose.msra.mxu0 0.0
    %392 = vmatprep.subr.mxu0 0.0
    %393 = vmatpush1.xpose.msra.mxu0 0.0
    %394 = vmatprep.subr.mxu0 0.0
    %395 = vmatpush1.xpose.msra.mxu0 0.0
    %396 = vmatprep.subr.mxu0 0.0
    %397 = vmatpush1.xpose.msra.mxu0 0.0
    %398 = vmatprep.subr.mxu0 0.0
    %399 = vmatpush1.xpose.msra.mxu0 0.0
    %400 = vmatprep.subr.mxu0 0.0
    %401 = vmatpush1.xpose.msra.mxu0 0.0
    %402 = vmatprep.subr.mxu0 0.0
    %403 = vmatpush1.xpose.msra.mxu0 0.0
    %404 = vmatprep.subr.mxu0 0.0
    %405 = vmatpush1.xpose.msra.mxu0 0.0
    %406 = vmatprep.subr.mxu0 0.0
    %407 = vmatpush1.xpose.msra.mxu0 0.0
    %408 = vmatprep.subr.mxu0 0.0
    %409 = vmatpush1.xpose.msra.mxu0 0.0
    %410 = vmatprep.subr.mxu0 0.0
    %411 = vmatpush1.xpose.msra.mxu0 0.0
    %412 = vmatprep.subr.mxu0 0.0
    %413 = vmatpush1.xpose.msra.mxu0 0.0
    %414 = vmatprep.subr.mxu0 0.0
    %415 = vmatpush1.xpose.msra.mxu0 0.0
    %416 = vmatprep.subr.mxu0 0.0
    %417 = vmatpush1.xpose.msra.mxu0 0.0
    %418 = vmatprep.subr.mxu0 0.0
    %419 = vmatpush1.xpose.msra.mxu0 0.0
    %420 = vmatprep.subr.mxu0 0.0
    %421 = vmatpush1.xpose.msra.mxu0 0.0
    %422 = vmatprep.mubr.f32.mxu0 0.0
    %423 = vmatmul.mubr.f32.gmra.mrb[0].mxu0 %v356
    %v424 = vpop.f32.mrb[0].mxu0
    %v425 = vadd.f32 0.0, %v424
    %v426 = vpop.f32.mrb[0].mxu0
    %427 = vdwg.mxu0
    %v428 = vmul.f32 %v22, %v22
    %v429 = vmul.f32 %v23, %v23
    %v430 = vsel %vm281, %v428, 0.0
    %431 = vadd.xlane.f32.xlu0 %v430
    %v432 = vpop.xlane.xlu0 %431
    %v433 = vsel %vm281, %v429, 0.0
    %434 = vadd.xlane.f32.xlu0 %v433
    %v435 = vpop.xlane.xlu0 %434
    %vm436 = vcmp.gt.f32.partialorder %v432, 0.0
    %vm437 = vcmp.gt.f32.partialorder %v435, 0.0
    %v438 = vrsqrt.pop %v432
    %v439 = vrsqrt.pop %v435
    %v440 = vsel %vm436, %v438, 0.0
    %v441 = vsel %vm437, %v439, 0.0
    %v442 = vmul.f32 %v352, %v440
    %v443 = vmul.f32 %v425, %v441
    %v446 = vlaneseq
    %v447 = vshrl.u32 %v446, 7
    %v448 = vsub.s32 %v250, %v447
    %v449 = vrot.slane %v440, %v448
    %v450 = vlaneseq
    %v451 = vshrl.u32 %v450, 7
    %v452 = vsub.s32 %v250, %v451
    %v453 = vrot.slane %v441, %v452
    %v454 = vsel %vm259, %v449, %v449
    %v455 = vsel %vm261, %v449, %v454
    %v456 = vsel %vm263, %v449, %v455
    %v457 = vsel %vm265, %v449, %v456
    %v458 = vsel %vm267, %v449, %v457
    %v459 = vsel %vm269, %v449, %v458
    %v460 = vsel %vm259, %v453, %v453
    %v461 = vsel %vm261, %v453, %v460
    %v462 = vsel %vm263, %v453, %v461
    %v463 = vsel %vm265, %v453, %v462
    %v464 = vsel %vm267, %v453, %v463
    %v465 = vsel %vm269, %v453, %v464
    %v468 = vmul.f32 %v442, %v459
    %v469 = vmul.f32 %v443, %v465
    %v470 = vsub.f32 %v279, %v468
    %v471 = vsub.f32 %v280, %v469
    %v472 = vld [vmem:[#allocation2] sm:$0xff]
    %v473 = vmul.f32 %v470, %v470
    %v474 = vmul.f32 %v471, %v471
    %vm475 = vcmask 64512
    %v476 = vsel %vm475, %v473, 0.0
    %v477 = vsel %vm475, %v474, 0.0
    %v478 = vadd.f32 %v476, %v477
    %v479 = vadd.f32 %v472, %v478
    %480 = vst.msk [vmem:[#allocation2] sm:$0xff] %vm475, %v479
    // Predicated region
    $region14: #{tpu_custom_call.1} parent=1 // pred_check
      %p481 = pneg %p12
    $region15: #{tpu_custom_call.1} parent=1 // pred_check_branch
      %483 = sbr.rel (%p481) target = $region17
    $region16: #{tpu_custom_call.1} parent=1 // pred_region
      %v484 = vld [vmem:[#allocation2] sm:$0xff]
      %v485 = vsel %vm475, %v484, 0.0
      %486 = vadd.xlane.f32.xlu0 %v485
      %v487 = vpop.xlane.xlu0 %486
      %v488 = vrot.slane %v487, 4
      %v489 = vadd.f32 %v487, %v488
      %v490 = vrot.slane %v489, 2
      %v491 = vadd.f32 %v489, %v490
      %v492 = vrot.slane %v491, 1
      %v493 = vadd.f32 %v491, %v492
      %s494 = vtos %v493
      %v495 = vstv %s494
      %vm496 = vcmask 0
      %497 = vst.msk [vmem:[#allocation3] sm:$0x1] %vm496, %v495
    $region17: #{tpu_custom_call.1} parent=1 // pred_fallthru
      _
    // Predicated region
    $region18: #{tpu_custom_call.1} parent=1 // pred_check
      _
    $region19: #{tpu_custom_call.1} parent=1 // pred_check_branch
      %499 = sbr.rel (0) target = $region21
    $region20: #{tpu_custom_call.1} parent=1 // pred_region
      %s501 = ssub.s32 16, 16
      %502 = vsyncadd [#allocation4], %s501
      %s504 = sshll.u32 [#allocation3], 4
      %s505 = int_to_ptr.vmem [resolvable:$true] %s504
      %507 = dma.vmem_to_hbm [thread:$0]  %s505, 16, %s2, [#allocation4]
    $region21: #{tpu_custom_call.1} parent=1 // pred_fallthru
      _
    // Predicated region
    $region22: #{tpu_custom_call.1} parent=1 // pred_check
      _
    $region23: #{tpu_custom_call.1} parent=1 // pred_check_branch
      %509 = sbr.rel (0) target = $region25
    $region24: #{tpu_custom_call.1} parent=1 // pred_region
      %510 = dma.done [#allocation4], 16
    $region25: #{tpu_custom_call.1} parent=1 // pred_fallthru
      _
    %511 = vsyncpa [#allocation4], 1

</llo_original>
